<compile_context>
chip_gen: v7x
topology: tpu7x:2x2x1
jax: 0.10.0
libtpu: 0.0.40
codegen_flags: <defaults>
</compile_context>

<pallas_src>
import functools

import jax
import jax.numpy as jnp
from jax import lax
from jax.experimental import pallas as pl
from jax.experimental.pallas import tpu as pltpu


def _round_up(x, m):
    return ((x + m - 1) // m) * m


def _diag_kernel(im_ref, s_ref, d_ref):
    # d[i] = <im_i, s_i>  (row-wise dot; f32 math to match the MXU f32 accum).
    prod = im_ref[...].astype(jnp.float32) * s_ref[...].astype(jnp.float32)
    d_ref[...] = jnp.sum(prod, axis=1, keepdims=True)


def _loss_kernel(im_ref, st_ref, dcol_ref, drow_ref, out_ref, row_acc, col_acc,
                 *, margin, max_violation, n, tm, tn):
    i = pl.program_id(0)
    j = pl.program_id(1)
    ni = pl.num_programs(0)
    nj = pl.num_programs(1)

    @pl.when(jnp.logical_and(i == 0, j == 0))
    def _init_out():
        out_ref[0, 0] = 0.0

    # (tm, D) @ (D, tn) -> (tm, tn) block of im @ s.T, f32 accumulation on MXU.
    scores = jnp.dot(im_ref[...], st_ref[...],
                     preferred_element_type=jnp.float32)

    # Validity (padding) + diagonal mask for this tile (n is a static int).
    row_g = i * tm + lax.broadcasted_iota(jnp.int32, (tm, tn), 0)
    col_g = j * tn + lax.broadcasted_iota(jnp.int32, (tm, tn), 1)
    keep = jnp.logical_and(jnp.logical_and(row_g < n, col_g < n),
                           row_g != col_g)

    dcol = dcol_ref[...]                      # (tm, 1) diag for this row block
    drow = drow_ref[...]                      # (1, tn) diag for this col block
    cost_s = jnp.where(keep, jnp.maximum(margin + scores - dcol, 0.0), 0.0)
    cost_im = jnp.where(keep, jnp.maximum(margin + scores - drow, 0.0), 0.0)

    if max_violation:
        # VSE++: hardest negative per row (cost_s) / per column (cost_im).
        col_start = pl.multiple_of(j * tn, tn)

        @pl.when(j == 0)
        def _init_rows():
            row_acc[...] = jnp.zeros_like(row_acc)

        @pl.when(i == 0)
        def _init_cols():
            col_acc[:, pl.ds(col_start, tn)] = jnp.zeros((1, tn), jnp.float32)

        row_acc[...] = jnp.maximum(
            row_acc[...], jnp.max(cost_s, axis=1, keepdims=True))
        col_acc[:, pl.ds(col_start, tn)] = jnp.maximum(
            col_acc[:, pl.ds(col_start, tn)],
            jnp.max(cost_im, axis=0, keepdims=True))

        @pl.when(j == nj - 1)
        def _finish_rows():
            out_ref[0, 0] += jnp.sum(row_acc[...])

        @pl.when(i == ni - 1)
        def _finish_cols():
            out_ref[0, 0] += jnp.sum(col_acc[:, pl.ds(col_start, tn)])
    else:
        # VSE0: plain sum of all hinge violations (padding & diag masked to 0).
        out_ref[0, 0] += jnp.sum(cost_s + cost_im)


def contrastive_loss(im, s, *, margin=0.0, max_violation=False, block_n=256):
    """Pallas TPU implementation of ContrastiveLoss.forward(im, s)."""
    assert im.ndim == 2 and s.ndim == 2 and im.shape == s.shape
    n, d = im.shape

    # Tile choice: single sublane-aligned tile when small; 128-aligned lane
    # tiles when the batch is tiled.
    bn = int(block_n)
    if n <= bn:
        t = _round_up(max(n, 1), 8)
    else:
        t = _round_up(bn, 128)
    np_ = _round_up(n, t)
    n_blocks = np_ // t

    if np_ != n:
        im_p = jnp.pad(im, ((0, np_ - n), (0, 0)))
        s_p = jnp.pad(s, ((0, np_ - n), (0, 0)))
    else:
        im_p, s_p = im, s

    # diag[i] = <im_i, s_i>: O(N*D) row-wise dot replaces O(N^2) masked reduce.
    diag = pl.pallas_call(
        _diag_kernel,
        out_shape=jax.ShapeDtypeStruct((np_, 1), jnp.float32),
        grid_spec=pltpu.PrefetchScalarGridSpec(
            num_scalar_prefetch=0,
            grid=(n_blocks,),
            in_specs=[pl.BlockSpec((t, d), lambda i: (i, 0)),
                      pl.BlockSpec((t, d), lambda i: (i, 0))],
            out_specs=pl.BlockSpec((t, 1), lambda i: (i, 0)),
        ),
        compiler_params=pltpu.CompilerParams(
            dimension_semantics=("parallel",)),
    )(im_p, s_p)

    dcol = diag                      # (Np, 1)
    drow = diag.reshape(1, np_)      # (1, Np)
    st = s_p.T                       # (D, Np): transposed once, outside grid.

    kernel = functools.partial(
        _loss_kernel,
        margin=float(margin),
        max_violation=bool(max_violation),
        n=int(n), tm=t, tn=t,
    )

    itemsize = jnp.dtype(im.dtype).itemsize
    cost = pl.CostEstimate(
        flops=2 * np_ * np_ * d,
        transcendentals=0,
        bytes_accessed=int(n_blocks * n_blocks * 2 * t * d * itemsize
                           + 2 * np_ * 4 + 4),
    )

    out = pl.pallas_call(
        kernel,
        out_shape=jax.ShapeDtypeStruct((1, 1), jnp.float32),
        grid_spec=pltpu.PrefetchScalarGridSpec(
            num_scalar_prefetch=0,
            grid=(n_blocks, n_blocks),
            in_specs=[
                pl.BlockSpec((t, d), lambda i, j: (i, 0)),   # im rows (block i)
                pl.BlockSpec((d, t), lambda i, j: (0, j)),   # s.T cols (block j)
                pl.BlockSpec((t, 1), lambda i, j: (i, 0)),   # diag, column form
                pl.BlockSpec((1, t), lambda i, j: (0, j)),   # diag, row form
            ],
            out_specs=pl.BlockSpec((1, 1), lambda i, j: (0, 0),
                                   memory_space=pltpu.SMEM),
            scratch_shapes=[
                pltpu.VMEM((t, 1), jnp.float32),    # running row-reduce (cost_s)
                pltpu.VMEM((1, np_), jnp.float32),  # running col-reduce (cost_im)
            ],
        ),
        compiler_params=pltpu.CompilerParams(
            # Both reductions (per-row over j, per-column over i) cross a grid
            # axis, so both axes must stay "arbitrary".
            # TODO(synk): v7x megacore — shard the row axis over the 2 TCs with
            # per-core partial column accumulators plus a tiny combine pass.
            dimension_semantics=("arbitrary", "arbitrary"),
        ),
        cost_estimate=cost,
    )(im_p, st, dcol, drow)
    return out[0, 0]


def _reference_loss(im, s, *, margin=0.0, max_violation=False):
    a = im.astype(jnp.float32)
    b = s.astype(jnp.float32)
    scores = jnp.dot(a, b.T, precision=lax.Precision.HIGHEST)
    n = scores.shape[0]
    diag = jnp.diag(scores).reshape(n, 1)
    eye = jnp.eye(n, dtype=bool)
    cost_s = jnp.maximum(margin + scores - diag, 0.0)
    cost_im = jnp.maximum(margin + scores - diag.T, 0.0)
    cost_s = jnp.where(eye, 0.0, cost_s)
    cost_im = jnp.where(eye, 0.0, cost_im)
    if max_violation:
        return jnp.sum(jnp.max(cost_s, axis=1)) + jnp.sum(jnp.max(cost_im, axis=0))
    return jnp.sum(cost_s) + jnp.sum(cost_im)


if __name__ == "__main__":
    key = jax.random.PRNGKey(0)
    ok = True
    #        (N,   D,  dtype,         block_n, rtol,  atol)
    cases = [(8,   32, jnp.float32,   256,     1e-4,  1e-3),  # single exact tile
             (20,  48, jnp.float32,   256,     1e-4,  1e-3),  # single padded tile
             (200, 32, jnp.float32,   128,     1e-4,  1e-2),  # 2x2 grid + padding
             (16,  64, jnp.bfloat16,  256,     3e-2,  3e-2)]  # bf16 -> MXU path
    for idx, (n, d, dtype, block_n, rtol, atol) in enumerate(cases):
        k1, k2 = jax.random.split(jax.random.fold_in(key, idx))
        im = jax.random.normal(k1, (n, d), dtype=jnp.float32).astype(dtype)
        s = jax.random.normal(k2, (n, d), dtype=jnp.float32).astype(dtype)
        for margin, max_violation in [(0.0, False), (0.2, False), (0.2, True)]:
            got = jax.block_until_ready(
                contrastive_loss(im, s, margin=margin,
                                 max_violation=max_violation, block_n=block_n))
            want = _reference_loss(im, s, margin=margin,
                                   max_violation=max_violation)
            if not bool(jnp.allclose(got, want, rtol=rtol, atol=atol)):
                ok = False
    print("KERNEL_OK" if ok else "KERNEL_MISMATCH")
</pallas_src>

<mosaic_0001>
module attributes {stable_mosaic.version = 11 : i64} {
  func.func @_diag_kernel(%arg0: i32, %arg1: memref<8x32xf32, #tpu.memory_space<vmem>>, %arg2: memref<8x32xf32, #tpu.memory_space<vmem>>, %arg3: memref<8x1xf32, #tpu.memory_space<vmem>>) attributes {dimension_semantics = [#tpu.dimension_semantics<parallel>], iteration_bounds = array<i64: 1>, scalar_prefetch = 0 : i64, scratch_operands = 0 : i64, tpu.core_type = #tpu.core_type<tc>, window_params = [{transform_indices = @transform_0, window_bounds = array<i64: 8, 32>}, {transform_indices = @transform_1, window_bounds = array<i64: 8, 32>}, {transform_indices = @transform_2, window_bounds = array<i64: 8, 1>}]} {
    %c0 = arith.constant 0 : index
    %c0_0 = arith.constant 0 : index
    %0 = vector.load %arg1[%c0, %c0_0] : memref<8x32xf32, #tpu.memory_space<vmem>>, vector<8x32xf32>
    %c0_1 = arith.constant 0 : index
    %c0_2 = arith.constant 0 : index
    %1 = vector.load %arg2[%c0_1, %c0_2] : memref<8x32xf32, #tpu.memory_space<vmem>>, vector<8x32xf32>
    %2 = arith.mulf %0, %1 : vector<8x32xf32>
    %cst = arith.constant dense<0.000000e+00> : vector<8xf32>
    %3 = vector.multi_reduction <add>, %2, %cst [1] : vector<8x32xf32> to vector<8xf32>
    %4 = vector.shape_cast %3 : vector<8xf32> to vector<8x1xf32>
    %c0_3 = arith.constant 0 : index
    %c0_4 = arith.constant 0 : index
    %5 = vector.load %arg3[%c0_3, %c0_4] : memref<8x1xf32, #tpu.memory_space<vmem>>, vector<8x1xf32>
    tpu.vector_store %arg3[%c0_3, %c0_4], %4 {strides = array<i32>} : memref<8x1xf32, #tpu.memory_space<vmem>>, vector<8x1xf32>,
    return
  }
  func.func @transform_0(%arg0: i32) -> (i32, i32) {
    %c0_i32 = arith.constant 0 : i32
    %c0_i32_0 = arith.constant 0 : i32
    return %arg0, %c0_i32 : i32, i32
  }
  func.func @transform_1(%arg0: i32) -> (i32, i32) {
    %c0_i32 = arith.constant 0 : i32
    %c0_i32_0 = arith.constant 0 : i32
    return %arg0, %c0_i32 : i32, i32
  }
  func.func @transform_2(%arg0: i32) -> (i32, i32) {
    %c0_i32 = arith.constant 0 : i32
    %c0_i32_0 = arith.constant 0 : i32
    return %arg0, %c0_i32 : i32, i32
  }
}

</mosaic_0001>

<llo_original>
// kernel: tpu_custom_call.1
$region0: #{tpu_custom_call.1}
  #allocation0 [shape = 'u32[]', space=smem, size = 0x4, offset = 0x4, fixed_abs, tag = 'smem constant byte address 0x4 - core index']
  #allocation1 [shape = 'u32[144,128]{1,0:T(1,128)}', space=vmem, size = 0x12000, scoped, tag = 'internal scratch']
  %s0 = inlined_call_operand.hbm [shape: f32[8,32], index: 0, kind: input, shape index: {}]
  %s1 = inlined_call_operand.hbm [shape: f32[8,32], index: 1, kind: input, shape index: {}]
  %s2 = inlined_call_operand.vmem [shape: f32[8,1], index: 2, kind: output, shape index: {}]
  %s3 = sld [smem:[#allocation0]]
  $region26: #{tpu_custom_call.1} parent=0
    _
  %s5 = ssub.s32 1, %s3
  %s6 = scalar_select 0, %s5, %s3
  $region1: #{tpu_custom_call.1} parent=0
    #allocation2 [shape = 'u8[4096]{0}', space=vmem, size = 0x1000, scoped, tag = 'input window, operand 0, single buffered']
    #allocation3 [shape = 's32[1]{0}', space=sflag, size = 0x4, scoped, tag = 'scoped memory for tpu_custom_call.1']
    #allocation4 [shape = 'u8[4096]{0}', space=vmem, size = 0x1000, scoped, tag = 'input window, operand 1, single buffered']
    #allocation5 [shape = 's32[1]{0}', space=sflag, size = 0x4, scoped, tag = 'scoped memory for tpu_custom_call.1']
    %7 = vsyncpa [#allocation3], 0
    %8 = vsyncpa [#allocation5], 0
    // Predicated region
    $region2: #{tpu_custom_call.1} parent=1 // pred_check
      _
    $region3: #{tpu_custom_call.1} parent=1 // pred_check_branch
      %10 = sbr.rel (0) target = $region5
    $region4: #{tpu_custom_call.1} parent=1 // pred_region
      %s12 = ssub.s32 128, 128
      %13 = vsyncadd [#allocation3], %s12
      %s15 = sshll.u32 [#allocation2], 4
      %s16 = int_to_ptr.vmem [resolvable:$true] %s15
      %18 = dma.hbm_to_vmem [thread:$0]  %s0, 128, %s16, [#allocation3]
    $region5: #{tpu_custom_call.1} parent=1 // pred_fallthru
      _
    // Predicated region
    $region6: #{tpu_custom_call.1} parent=1 // pred_check
      _
    $region7: #{tpu_custom_call.1} parent=1 // pred_check_branch
      %20 = sbr.rel (0) target = $region9
    $region8: #{tpu_custom_call.1} parent=1 // pred_region
      %s22 = ssub.s32 128, 128
      %23 = vsyncadd [#allocation5], %s22
      %s25 = sshll.u32 [#allocation4], 4
      %s26 = int_to_ptr.vmem [resolvable:$true] %s25
      %28 = dma.hbm_to_vmem [thread:$0]  %s1, 128, %s26, [#allocation5]
    $region9: #{tpu_custom_call.1} parent=1 // pred_fallthru
      _
    // Predicated region
    $region10: #{tpu_custom_call.1} parent=1 // pred_check
      _
    $region11: #{tpu_custom_call.1} parent=1 // pred_check_branch
      %30 = sbr.rel (0) target = $region13
    $region12: #{tpu_custom_call.1} parent=1 // pred_region
      %31 = dma.done [#allocation3], 128
    $region13: #{tpu_custom_call.1} parent=1 // pred_fallthru
      _
    // Predicated region
    $region14: #{tpu_custom_call.1} parent=1 // pred_check
      _
    $region15: #{tpu_custom_call.1} parent=1 // pred_check_branch
      %33 = sbr.rel (0) target = $region17
    $region16: #{tpu_custom_call.1} parent=1 // pred_region
      %34 = dma.done [#allocation5], 128
    $region17: #{tpu_custom_call.1} parent=1 // pred_fallthru
      _
    %v35 = vld [vmem:[#allocation2] sm:$0xff]
    %v36 = vld [vmem:[#allocation4] sm:$0xff]
    %v37 = vmul.f32 %v35, %v36
    %vm38 = vcmask 261120
    %v39 = vsel %vm38, %v37, 0.0
    %40 = vadd.xlane.f32.xlu0 %v39
    %v41 = vpop.xlane.xlu0 %40
    %vm42 = vcmask 7168
    %43 = vst.msk [vmem:[%s2] sm:$0xff] %vm42, %v41
    // Predicated region
    $region18: #{tpu_custom_call.1} parent=1 // pred_check
      _
    $region19: #{tpu_custom_call.1} parent=1 // pred_check_branch
      %45 = sbr.rel (0) target = $region21
    $region20: #{tpu_custom_call.1} parent=1 // pred_region
      _
    $region21: #{tpu_custom_call.1} parent=1 // pred_fallthru
      _
    // Predicated region
    $region22: #{tpu_custom_call.1} parent=1 // pred_check
      _
    $region23: #{tpu_custom_call.1} parent=1 // pred_check_branch
      %47 = sbr.rel (0) target = $region25
    $region24: #{tpu_custom_call.1} parent=1 // pred_region
      _
    $region25: #{tpu_custom_call.1} parent=1 // pred_fallthru
      _
    %48 = vsyncpa [#allocation3], 1
    %49 = vsyncpa [#allocation5], 1

</llo_original>
